<compile_context>
chip_gen: v6e
topology: v6e:2x2x1
jax: 0.10.0
libtpu: 0.0.40
codegen_flags: <defaults>
</compile_context>

<pallas_src>
import functools

import jax
import jax.numpy as jnp
import numpy as np
from jax import lax
from jax.experimental import pallas as pl
from jax.experimental.pallas import tpu as pltpu

_EPS = 1e-5


def _double_conv_kernel(x_ref, bw1_ref, bw2_ref, gb_ref, o_ref,
                        *, N, H, W, cmid, cout):
    NH = N * H
    inv_count = 1.0 / float(N * H * W)
    L1 = W * cmid
    L2 = W * cout

    def shifted_lhs(x2d):
        """(NH, L) f32 -> (NH, 3L) bf16 rows [x[h-1] | x[h] | x[h+1]].

        pltpu.roll runs on the XLU (frees VALU / store slots); the iota masks
        zero both the 'same'-padding rows at h==0 / h==H-1 and the cross-batch
        wrap, so a flat (NH, L) roll is safe.
        """
        nh, l = x2d.shape
        row = lax.broadcasted_iota(jnp.int32, (nh, l), 0) % H
        zero = jnp.zeros_like(x2d)
        x_up = jnp.where(row == 0, zero, pltpu.roll(x2d, 1, 0))        # x[h-1]
        x_dn = jnp.where(row == H - 1, zero, pltpu.roll(x2d, nh - 1, 0))  # x[h+1]
        return jnp.concatenate([x_up, x2d, x_dn], axis=-1).astype(jnp.bfloat16)

    def channel_mix(l, c):
        """(l, l) 0/1 matrix, P[a, b] = 1 iff a % c == b % c, built in-kernel."""
        li = lax.broadcasted_iota(jnp.int32, (l, l), 0) % c
        lj = lax.broadcasted_iota(jnp.int32, (l, l), 1) % c
        return (li == lj).astype(jnp.float32)

    p1 = channel_mix(L1, cmid)
    p2 = p1 if cmid == cout else channel_mix(L2, cout)   # dedupe when identical

    def bn_relu(h2d, p, gamma_l, beta_l):
        """Training-mode BN + ReLU, fused one-pass, f32 elementwise (v5e-safe)."""
        # TODO(synk): one-pass E[x^2]-E[x]^2 can cancel at extreme activation
        # scales; switch to a two-sweep / partial-sum scheme when gridding.
        lane_sum = jnp.sum(h2d, axis=0, keepdims=True)                 # (1, L)
        lane_sq = jnp.sum(h2d * h2d, axis=0, keepdims=True)            # (1, L)
        stats = jnp.concatenate([lane_sum, lane_sq], axis=0)           # (2, L)
        # One fused mix matmul turns per-lane sums into per-channel sums
        # broadcast back to lanes (mean row 0, E[x^2] row 1).
        mixed = jnp.dot(stats, p, preferred_element_type=jnp.float32) * inv_count
        mean_l = mixed[0:1, :]
        ex2_l = mixed[1:2, :]
        var_l = ex2_l - mean_l * mean_l                                # biased var
        inv_l = lax.rsqrt(var_l + _EPS)
        scale_l = gamma_l * inv_l                                      # gamma/sqrt(var+eps)
        shift_l = beta_l - mean_l * scale_l
        return jnp.maximum(h2d * scale_l + shift_l, 0.0)               # one FMA + max

    x2d = x_ref[...].reshape(NH, x_ref.shape[-1])

    # conv1: ONE (NH, 3*W*cin) x (3*W*cin, W*cmid) bf16 matmul, f32 accumulate.
    h1 = jnp.dot(shifted_lhs(x2d), bw1_ref[...],
                 preferred_element_type=jnp.float32)                   # (NH, L1)
    h1 = bn_relu(h1, p1, gb_ref[0:1, :L1], gb_ref[1:2, :L1])

    # conv2: ONE (NH, 3*W*cmid) x (3*W*cmid, W*cout) bf16 matmul.
    h2 = jnp.dot(shifted_lhs(h1), bw2_ref[...],
                 preferred_element_type=jnp.float32)                   # (NH, L2)
    h2 = bn_relu(h2, p2, gb_ref[2:3, :L2], gb_ref[3:4, :L2])

    o_ref[...] = h2.reshape(N, H, L2).astype(o_ref.dtype)              # lane-dense store


def _banded_weights_fused(w_hwio, win):
    """HWIO (3,3,cin,cout) -> (3*win*cin, win*cout) bf16 banded weight matrix.

    B[dy, wi*cin+ci, wo*cout+co] = w[dy, dx, ci, co] with dx = wi - wo + 1 in
    {0,1,2}; out-of-range wi entries are zero ('same' zero padding along W).
    The three dy taps are stacked along K; the kernel's LHS supplies
    [x[h-1] | x[h] | x[h+1]] in the same order.
    """
    kh, kw, cin, cout = w_hwio.shape
    ind = np.zeros((win, win, kw), np.float32)
    for wo in range(win):
        for dx in range(kw):
            wi = wo + dx - 1
            if 0 <= wi < win:
                ind[wi, wo, dx] = 1.0
    b = jnp.einsum('iox,yxcd->yicod', jnp.asarray(ind),
                   w_hwio.astype(jnp.float32))
    return b.reshape(kh * win * cin, win * cout).astype(jnp.bfloat16)


def _pack_affine(g1, b1, g2, b2, win):
    """Pack the four per-channel BN vectors into one (4, max(L1,L2)) lane array."""
    l1 = win * g1.shape[0]
    l2 = win * g2.shape[0]
    lmax = max(l1, l2)

    def lane(v, l):
        t = jnp.tile(v.astype(jnp.float32), win)
        return jnp.pad(t, (0, lmax - l))

    return jnp.stack([lane(g1, l1), lane(b1, l1), lane(g2, l2), lane(b2, l2)])


def double_conv_pallas(x_nchw, w1, g1, b1, w2, g2, b2):
    """x_nchw: (N, Cin, H, W) f32; w: HWIO (3,3,Cin,Cout). Returns NCHW f32."""
    N, cin, H, W = x_nchw.shape
    cmid = w1.shape[-1]
    cout = w2.shape[-1]
    L1, L2 = W * cmid, W * cout

    # Lane-dense activation layout: NCHW -> NHWC -> (N, H, W*Cin).
    x = jnp.transpose(x_nchw, (0, 2, 3, 1)).astype(jnp.float32)
    x = x.reshape(N, H, W * cin)

    bw1 = _banded_weights_fused(w1, W)      # (3*W*cin,  W*cmid) bf16
    bw2 = _banded_weights_fused(w2, W)      # (3*W*cmid, W*cout) bf16
    gb = _pack_affine(g1, b1, g2, b2, W)    # (4, max(L1, L2)) f32

    kernel = functools.partial(_double_conv_kernel,
                               N=N, H=H, W=W, cmid=cmid, cout=cout)

    nh = N * H
    flops = (2 * nh * (3 * W * cin) * L1          # conv1 fused matmul
             + 2 * nh * (3 * W * cmid) * L2       # conv2 fused matmul
             + 2 * 2 * 2 * (L1 * L1 + L2 * L2)    # BN channel-mix (M=2)
             + 10 * nh * (L1 + L2))               # BN/ReLU elementwise
    bytes_acc = int(x.size * 4 + bw1.size * 2 + bw2.size * 2 + gb.size * 4
                    + N * H * W * cout * 4)

    vmem = pl.BlockSpec(memory_space=pltpu.MemorySpace.VMEM)
    out = pl.pallas_call(
        kernel,
        out_shape=jax.ShapeDtypeStruct((N, H, W * cout), jnp.float32),
        in_specs=[vmem] * 4,
        out_specs=vmem,
        cost_estimate=pl.CostEstimate(
            flops=int(flops),
            transcendentals=L1 + L2,
            bytes_accessed=bytes_acc),
    )(x, bw1, bw2, gb)

    out = out.reshape(N, H, W, cout)
    return jnp.transpose(out, (0, 3, 1, 2))              # back to NCHW


def double_conv_reference(x_nchw, w1, g1, b1, w2, g2, b2):
    """Pure-JAX reference (same math as the PyTorch module in training mode)."""
    x = jnp.transpose(x_nchw, (0, 2, 3, 1)).astype(jnp.float32)
    dn = ('NHWC', 'HWIO', 'NHWC')

    def bn_relu(h, g, b):
        mean = jnp.mean(h, axis=(0, 1, 2), keepdims=True)
        var = jnp.mean((h - mean) ** 2, axis=(0, 1, 2), keepdims=True)
        y = (h - mean) * lax.rsqrt(var + _EPS) * g.reshape(1, 1, 1, -1) \
            + b.reshape(1, 1, 1, -1)
        return jnp.maximum(y, 0.0)

    h = lax.conv_general_dilated(x, w1, (1, 1), 'SAME', dimension_numbers=dn)
    h = bn_relu(h, g1, b1)
    h = lax.conv_general_dilated(h, w2, (1, 1), 'SAME', dimension_numbers=dn)
    h = bn_relu(h, g2, b2)
    return jnp.transpose(h, (0, 3, 1, 2))


if __name__ == "__main__":
    # Small shapes consistent with DoubleConv(in_channel=4, out_channel=8).
    N, Cin, H, W = 2, 4, 16, 16
    Cmid = 8      # mid_channel defaults to out_channel
    Cout = 8

    key = jax.random.PRNGKey(0)
    kx, kw1, kw2, kg1, kb1, kg2, kb2 = jax.random.split(key, 7)

    x = jax.random.normal(kx, (N, Cin, H, W), jnp.float32)
    # Conv weights (HWIO), no bias (matches bias=False).
    w1 = 0.2 * jax.random.normal(kw1, (3, 3, Cin, Cmid), jnp.float32)
    w2 = 0.2 * jax.random.normal(kw2, (3, 3, Cmid, Cout), jnp.float32)
    # BatchNorm affine parameters (exercise gamma/beta paths).
    g1 = 1.0 + 0.1 * jax.random.normal(kg1, (Cmid,), jnp.float32)
    b1 = 0.1 * jax.random.normal(kb1, (Cmid,), jnp.float32)
    g2 = 1.0 + 0.1 * jax.random.normal(kg2, (Cout,), jnp.float32)
    b2 = 0.1 * jax.random.normal(kb2, (Cout,), jnp.float32)

    out = double_conv_pallas(x, w1, g1, b1, w2, g2, b2)
    out = jax.block_until_ready(out)

    ref = jax.block_until_ready(double_conv_reference(x, w1, g1, b1, w2, g2, b2))
    # bf16 MXU operands through two conv+BN stages: worst-element bound ~5e-2.
    np.testing.assert_allclose(np.asarray(out), np.asarray(ref),
                               rtol=5e-2, atol=5e-2)

    print("KERNEL_OK")
</pallas_src>

<mosaic_0001>
module attributes {stable_mosaic.version = 11 : i64} {
  func.func @_double_conv_kernel(%arg0: memref<2x16x64xf32, #tpu.memory_space<vmem>>, %arg1: memref<192x128xbf16, #tpu.memory_space<vmem>>, %arg2: memref<384x128xbf16, #tpu.memory_space<vmem>>, %arg3: memref<4x128xf32, #tpu.memory_space<vmem>>, %arg4: memref<2x16x128xf32, #tpu.memory_space<vmem>>) attributes {dimension_semantics = [], scalar_prefetch = 0 : i64, scratch_operands = 0 : i64, tpu.core_type = #tpu.core_type<tc>} {
    %0 = tpu.iota {dimensions = array<i32: 0>} : vector<128x128xi32>
    %c8_i32 = arith.constant 8 : i32
    %c0_i32 = arith.constant 0 : i32
    %1 = arith.cmpi eq, %c8_i32, %c0_i32 : i32
    %c1_i32 = arith.constant 1 : i32
    %2 = arith.select %1, %c1_i32, %c8_i32 : i32
    %3 = vector.broadcast %2 : i32 to vector<128x128xi32>
    %4 = arith.remsi %0, %3 : vector<128x128xi32>
    %c0_i32_0 = arith.constant 0 : i32
    %5 = vector.broadcast %c0_i32_0 : i32 to vector<128x128xi32>
    %6 = arith.cmpi ne, %4, %5 : vector<128x128xi32>
    %c0_i32_1 = arith.constant 0 : i32
    %7 = vector.broadcast %c0_i32_1 : i32 to vector<128x128xi32>
    %8 = arith.cmpi slt, %4, %7 : vector<128x128xi32>
    %c0_i32_2 = arith.constant 0 : i32
    %9 = arith.cmpi slt, %2, %c0_i32_2 : i32
    %10 = vector.broadcast %9 : i1 to vector<128x128xi1>
    %11 = vector.broadcast %10 : vector<128x128xi1> to vector<128x128xi1>
    %12 = arith.xori %8, %11 : vector<128x128xi1>
    %13 = arith.andi %12, %6 : vector<128x128xi1>
    %14 = vector.broadcast %2 : i32 to vector<128x128xi32>
    %15 = arith.addi %4, %14 : vector<128x128xi32>
    %16 = arith.select %13, %15, %4 : vector<128x128xi1>, vector<128x128xi32>
    %17 = tpu.iota {dimensions = array<i32: 1>} : vector<128x128xi32>
    %c8_i32_3 = arith.constant 8 : i32
    %c0_i32_4 = arith.constant 0 : i32
    %18 = arith.cmpi eq, %c8_i32_3, %c0_i32_4 : i32
    %c1_i32_5 = arith.constant 1 : i32
    %19 = arith.select %18, %c1_i32_5, %c8_i32_3 : i32
    %20 = vector.broadcast %19 : i32 to vector<128x128xi32>
    %21 = arith.remsi %17, %20 : vector<128x128xi32>
    %c0_i32_6 = arith.constant 0 : i32
    %22 = vector.broadcast %c0_i32_6 : i32 to vector<128x128xi32>
    %23 = arith.cmpi ne, %21, %22 : vector<128x128xi32>
    %c0_i32_7 = arith.constant 0 : i32
    %24 = vector.broadcast %c0_i32_7 : i32 to vector<128x128xi32>
    %25 = arith.cmpi slt, %21, %24 : vector<128x128xi32>
    %c0_i32_8 = arith.constant 0 : i32
    %26 = arith.cmpi slt, %19, %c0_i32_8 : i32
    %27 = vector.broadcast %26 : i1 to vector<128x128xi1>
    %28 = vector.broadcast %27 : vector<128x128xi1> to vector<128x128xi1>
    %29 = arith.xori %25, %28 : vector<128x128xi1>
    %30 = arith.andi %29, %23 : vector<128x128xi1>
    %31 = vector.broadcast %19 : i32 to vector<128x128xi32>
    %32 = arith.addi %21, %31 : vector<128x128xi32>
    %33 = arith.select %30, %32, %21 : vector<128x128xi1>, vector<128x128xi32>
    %34 = arith.cmpi eq, %16, %33 : vector<128x128xi32>
    %35 = arith.extui %34 : vector<128x128xi1> to vector<128x128xi32>
    %36 = arith.sitofp %35 : vector<128x128xi32> to vector<128x128xf32>
    %c0 = arith.constant 0 : index
    %c0_9 = arith.constant 0 : index
    %c0_10 = arith.constant 0 : index
    %37 = vector.load %arg0[%c0, %c0_9, %c0_10] : memref<2x16x64xf32, #tpu.memory_space<vmem>>, vector<2x16x64xf32>
    %38 = vector.shape_cast %37 : vector<2x16x64xf32> to vector<32x64xf32>
    %39 = tpu.iota {dimensions = array<i32: 0>} : vector<32x64xi32>
    %c16_i32 = arith.constant 16 : i32
    %c0_i32_11 = arith.constant 0 : i32
    %40 = arith.cmpi eq, %c16_i32, %c0_i32_11 : i32
    %c1_i32_12 = arith.constant 1 : i32
    %41 = arith.select %40, %c1_i32_12, %c16_i32 : i32
    %42 = vector.broadcast %41 : i32 to vector<32x64xi32>
    %43 = arith.remsi %39, %42 : vector<32x64xi32>
    %c0_i32_13 = arith.constant 0 : i32
    %44 = vector.broadcast %c0_i32_13 : i32 to vector<32x64xi32>
    %45 = arith.cmpi ne, %43, %44 : vector<32x64xi32>
    %c0_i32_14 = arith.constant 0 : i32
    %46 = vector.broadcast %c0_i32_14 : i32 to vector<32x64xi32>
    %47 = arith.cmpi slt, %43, %46 : vector<32x64xi32>
    %c0_i32_15 = arith.constant 0 : i32
    %48 = arith.cmpi slt, %41, %c0_i32_15 : i32
    %49 = vector.broadcast %48 : i1 to vector<32x64xi1>
    %50 = vector.broadcast %49 : vector<32x64xi1> to vector<32x64xi1>
    %51 = arith.xori %47, %50 : vector<32x64xi1>
    %52 = arith.andi %51, %45 : vector<32x64xi1>
    %53 = vector.broadcast %41 : i32 to vector<32x64xi32>
    %54 = arith.addi %43, %53 : vector<32x64xi32>
    %55 = arith.select %52, %54, %43 : vector<32x64xi1>, vector<32x64xi32>
    %cst = arith.constant 0.000000e+00 : f32
    %56 = vector.broadcast %cst : f32 to vector<32x64xf32>
    %c0_i32_16 = arith.constant 0 : i32
    %57 = vector.broadcast %c0_i32_16 : i32 to vector<32x64xi32>
    %58 = arith.cmpi eq, %55, %57 : vector<32x64xi32>
    %c1_i32_17 = arith.constant 1 : i32
    %59 = tpu.dynamic_rotate %38 by %c1_i32_17 dim 0 : vector<32x64xf32>, i32 -> vector<32x64xf32>
    %60 = arith.select %58, %56, %59 : vector<32x64xi1>, vector<32x64xf32>
    %c15_i32 = arith.constant 15 : i32
    %61 = vector.broadcast %c15_i32 : i32 to vector<32x64xi32>
    %62 = arith.cmpi eq, %55, %61 : vector<32x64xi32>
    %c31_i32 = arith.constant 31 : i32
    %63 = tpu.dynamic_rotate %38 by %c31_i32 dim 0 : vector<32x64xf32>, i32 -> vector<32x64xf32>
    %64 = arith.select %62, %56, %63 : vector<32x64xi1>, vector<32x64xf32>
    %65 = tpu.concatenate %60, %38, %64 in 1 : vector<32x64xf32>, vector<32x64xf32>, vector<32x64xf32> -> vector<32x192xf32>
    %66 = arith.truncf %65 : vector<32x192xf32> to vector<32x192xbf16>
    %c0_18 = arith.constant 0 : index
    %c0_19 = arith.constant 0 : index
    %67 = vector.load %arg1[%c0_18, %c0_19] : memref<192x128xbf16, #tpu.memory_space<vmem>>, vector<192x128xbf16>
    %cst_20 = arith.constant dense<0.000000e+00> : vector<32x128xf32>
    %68 = tpu.matmul %66, %67, %cst_20 {dimension_numbers = #tpu.dot_dimension_numbers<[1], [0], [0], [1], [0, 0, 1, 1], [], []>} : vector<32x192xbf16>, vector<192x128xbf16>, vector<32x128xf32> -> vector<32x128xf32>
    %c0_21 = arith.constant 0 : index
    %c0_22 = arith.constant 0 : index
    %69 = vector.load %arg3[%c0_21, %c0_22] : memref<4x128xf32, #tpu.memory_space<vmem>>, vector<1x128xf32>
    %c1 = arith.constant 1 : index
    %c0_23 = arith.constant 0 : index
    %70 = vector.load %arg3[%c1, %c0_23] : memref<4x128xf32, #tpu.memory_space<vmem>>, vector<1x128xf32>
    %cst_24 = arith.constant dense<0.000000e+00> : vector<128xf32>
    %71 = vector.multi_reduction <add>, %68, %cst_24 [0] : vector<32x128xf32> to vector<128xf32>
    %72 = vector.shape_cast %71 : vector<128xf32> to vector<1x128xf32>
    %73 = arith.mulf %68, %68 : vector<32x128xf32>
    %cst_25 = arith.constant dense<0.000000e+00> : vector<128xf32>
    %74 = vector.multi_reduction <add>, %73, %cst_25 [0] : vector<32x128xf32> to vector<128xf32>
    %75 = vector.shape_cast %74 : vector<128xf32> to vector<1x128xf32>
    %76 = tpu.concatenate %72, %75 in 0 : vector<1x128xf32>, vector<1x128xf32> -> vector<2x128xf32>
    %cst_26 = arith.constant dense<0.000000e+00> : vector<2x128xf32>
    %77 = tpu.matmul %76, %36, %cst_26 {dimension_numbers = #tpu.dot_dimension_numbers<[1], [0], [0], [1], [0, 0, 1, 1], [], []>} : vector<2x128xf32>, vector<128x128xf32>, vector<2x128xf32> -> vector<2x128xf32>
    %cst_27 = arith.constant 0.001953125 : f32
    %78 = vector.broadcast %cst_27 : f32 to vector<2x128xf32>
    %79 = arith.mulf %77, %78 : vector<2x128xf32>
    %80 = vector.extract_strided_slice %79 {offsets = [0, 0], sizes = [1, 128], strides = [1, 1]} : vector<2x128xf32> to vector<1x128xf32>
    %81 = vector.extract_strided_slice %79 {offsets = [1, 0], sizes = [1, 128], strides = [1, 1]} : vector<2x128xf32> to vector<1x128xf32>
    %82 = arith.mulf %80, %80 : vector<1x128xf32>
    %83 = arith.subf %81, %82 : vector<1x128xf32>
    %cst_28 = arith.constant 9.99999974E-6 : f32
    %84 = vector.broadcast %cst_28 : f32 to vector<1x128xf32>
    %85 = arith.addf %83, %84 : vector<1x128xf32>
    %86 = math.rsqrt %85 : vector<1x128xf32>
    %87 = arith.mulf %69, %86 : vector<1x128xf32>
    %88 = arith.mulf %80, %87 : vector<1x128xf32>
    %89 = arith.subf %70, %88 : vector<1x128xf32>
    %90 = vector.broadcast %87 : vector<1x128xf32> to vector<32x128xf32>
    %91 = arith.mulf %68, %90 : vector<32x128xf32>
    %92 = vector.broadcast %89 : vector<1x128xf32> to vector<32x128xf32>
    %93 = arith.addf %91, %92 : vector<32x128xf32>
    %cst_29 = arith.constant 0.000000e+00 : f32
    %94 = vector.broadcast %cst_29 : f32 to vector<32x128xf32>
    %95 = arith.maximumf %93, %94 : vector<32x128xf32>
    %96 = tpu.iota {dimensions = array<i32: 0>} : vector<32x128xi32>
    %c16_i32_30 = arith.constant 16 : i32
    %c0_i32_31 = arith.constant 0 : i32
    %97 = arith.cmpi eq, %c16_i32_30, %c0_i32_31 : i32
    %c1_i32_32 = arith.constant 1 : i32
    %98 = arith.select %97, %c1_i32_32, %c16_i32_30 : i32
    %99 = vector.broadcast %98 : i32 to vector<32x128xi32>
    %100 = arith.remsi %96, %99 : vector<32x128xi32>
    %c0_i32_33 = arith.constant 0 : i32
    %101 = vector.broadcast %c0_i32_33 : i32 to vector<32x128xi32>
    %102 = arith.cmpi ne, %100, %101 : vector<32x128xi32>
    %c0_i32_34 = arith.constant 0 : i32
    %103 = vector.broadcast %c0_i32_34 : i32 to vector<32x128xi32>
    %104 = arith.cmpi slt, %100, %103 : vector<32x128xi32>
    %c0_i32_35 = arith.constant 0 : i32
    %105 = arith.cmpi slt, %98, %c0_i32_35 : i32
    %106 = vector.broadcast %105 : i1 to vector<32x128xi1>
    %107 = vector.broadcast %106 : vector<32x128xi1> to vector<32x128xi1>
    %108 = arith.xori %104, %107 : vector<32x128xi1>
    %109 = arith.andi %108, %102 : vector<32x128xi1>
    %110 = vector.broadcast %98 : i32 to vector<32x128xi32>
    %111 = arith.addi %100, %110 : vector<32x128xi32>
    %112 = arith.select %109, %111, %100 : vector<32x128xi1>, vector<32x128xi32>
    %cst_36 = arith.constant 0.000000e+00 : f32
    %113 = vector.broadcast %cst_36 : f32 to vector<32x128xf32>
    %c0_i32_37 = arith.constant 0 : i32
    %114 = vector.broadcast %c0_i32_37 : i32 to vector<32x128xi32>
    %115 = arith.cmpi eq, %112, %114 : vector<32x128xi32>
    %c1_i32_38 = arith.constant 1 : i32
    %116 = tpu.dynamic_rotate %95 by %c1_i32_38 dim 0 : vector<32x128xf32>, i32 -> vector<32x128xf32>
    %117 = arith.select %115, %113, %116 : vector<32x128xi1>, vector<32x128xf32>
    %c15_i32_39 = arith.constant 15 : i32
    %118 = vector.broadcast %c15_i32_39 : i32 to vector<32x128xi32>
    %119 = arith.cmpi eq, %112, %118 : vector<32x128xi32>
    %c31_i32_40 = arith.constant 31 : i32
    %120 = tpu.dynamic_rotate %95 by %c31_i32_40 dim 0 : vector<32x128xf32>, i32 -> vector<32x128xf32>
    %121 = arith.select %119, %113, %120 : vector<32x128xi1>, vector<32x128xf32>
    %122 = tpu.concatenate %117, %95, %121 in 1 : vector<32x128xf32>, vector<32x128xf32>, vector<32x128xf32> -> vector<32x384xf32>
    %123 = arith.truncf %122 : vector<32x384xf32> to vector<32x384xbf16>
    %c0_41 = arith.constant 0 : index
    %c0_42 = arith.constant 0 : index
    %124 = vector.load %arg2[%c0_41, %c0_42] : memref<384x128xbf16, #tpu.memory_space<vmem>>, vector<384x128xbf16>
    %cst_43 = arith.constant dense<0.000000e+00> : vector<32x128xf32>
    %125 = tpu.matmul %123, %124, %cst_43 {dimension_numbers = #tpu.dot_dimension_numbers<[1], [0], [0], [1], [0, 0, 1, 1], [], []>} : vector<32x384xbf16>, vector<384x128xbf16>, vector<32x128xf32> -> vector<32x128xf32>
    %c2 = arith.constant 2 : index
    %c0_44 = arith.constant 0 : index
    %126 = vector.load %arg3[%c2, %c0_44] : memref<4x128xf32, #tpu.memory_space<vmem>>, vector<1x128xf32>
    %c3 = arith.constant 3 : index
    %c0_45 = arith.constant 0 : index
    %127 = vector.load %arg3[%c3, %c0_45] : memref<4x128xf32, #tpu.memory_space<vmem>>, vector<1x128xf32>
    %cst_46 = arith.constant dense<0.000000e+00> : vector<128xf32>
    %128 = vector.multi_reduction <add>, %125, %cst_46 [0] : vector<32x128xf32> to vector<128xf32>
    %129 = vector.shape_cast %128 : vector<128xf32> to vector<1x128xf32>
    %130 = arith.mulf %125, %125 : vector<32x128xf32>
    %cst_47 = arith.constant dense<0.000000e+00> : vector<128xf32>
    %131 = vector.multi_reduction <add>, %130, %cst_47 [0] : vector<32x128xf32> to vector<128xf32>
    %132 = vector.shape_cast %131 : vector<128xf32> to vector<1x128xf32>
    %133 = tpu.concatenate %129, %132 in 0 : vector<1x128xf32>, vector<1x128xf32> -> vector<2x128xf32>
    %cst_48 = arith.constant dense<0.000000e+00> : vector<2x128xf32>
    %134 = tpu.matmul %133, %36, %cst_48 {dimension_numbers = #tpu.dot_dimension_numbers<[1], [0], [0], [1], [0, 0, 1, 1], [], []>} : vector<2x128xf32>, vector<128x128xf32>, vector<2x128xf32> -> vector<2x128xf32>
    %cst_49 = arith.constant 0.001953125 : f32
    %135 = vector.broadcast %cst_49 : f32 to vector<2x128xf32>
    %136 = arith.mulf %134, %135 : vector<2x128xf32>
    %137 = vector.extract_strided_slice %136 {offsets = [0, 0], sizes = [1, 128], strides = [1, 1]} : vector<2x128xf32> to vector<1x128xf32>
    %138 = vector.extract_strided_slice %136 {offsets = [1, 0], sizes = [1, 128], strides = [1, 1]} : vector<2x128xf32> to vector<1x128xf32>
    %139 = arith.mulf %137, %137 : vector<1x128xf32>
    %140 = arith.subf %138, %139 : vector<1x128xf32>
    %cst_50 = arith.constant 9.99999974E-6 : f32
    %141 = vector.broadcast %cst_50 : f32 to vector<1x128xf32>
    %142 = arith.addf %140, %141 : vector<1x128xf32>
    %143 = math.rsqrt %142 : vector<1x128xf32>
    %144 = arith.mulf %126, %143 : vector<1x128xf32>
    %145 = arith.mulf %137, %144 : vector<1x128xf32>
    %146 = arith.subf %127, %145 : vector<1x128xf32>
    %147 = vector.broadcast %144 : vector<1x128xf32> to vector<32x128xf32>
    %148 = arith.mulf %125, %147 : vector<32x128xf32>
    %149 = vector.broadcast %146 : vector<1x128xf32> to vector<32x128xf32>
    %150 = arith.addf %148, %149 : vector<32x128xf32>
    %cst_51 = arith.constant 0.000000e+00 : f32
    %151 = vector.broadcast %cst_51 : f32 to vector<32x128xf32>
    %152 = arith.maximumf %150, %151 : vector<32x128xf32>
    %153 = vector.shape_cast %152 : vector<32x128xf32> to vector<2x16x128xf32>
    %c0_52 = arith.constant 0 : index
    %c0_53 = arith.constant 0 : index
    %c0_54 = arith.constant 0 : index
    %154 = vector.load %arg4[%c0_52, %c0_53, %c0_54] : memref<2x16x128xf32, #tpu.memory_space<vmem>>, vector<2x16x128xf32>
    tpu.vector_store %arg4[%c0_52, %c0_53, %c0_54], %153 {strides = array<i32>} : memref<2x16x128xf32, #tpu.memory_space<vmem>>, vector<2x16x128xf32>,
    return
  }
}

</mosaic_0001>

<llo_original>
// kernel: tpu_custom_call.1
$region0: #{tpu_custom_call.1}
  #allocation0 [shape = 'u32[]', space=smem, size = 0x4, offset = 0x4, fixed_abs, tag = 'smem constant byte address 0x4 - core index']
  #allocation1 [shape = 'u32[144,128]{1,0:T(1,128)}', space=vmem, size = 0x12000, scoped, tag = 'internal scratch']
  %s0 = inlined_call_operand.hbm [shape: f32[2,16,64], index: 0, kind: input, shape index: {}]
  %s1 = inlined_call_operand.hbm [shape: bf16[192,128], index: 1, kind: input, shape index: {}]
  %s2 = inlined_call_operand.hbm [shape: bf16[384,128], index: 2, kind: input, shape index: {}]
  %s3 = inlined_call_operand.vmem [shape: f32[4,128], index: 3, kind: input, shape index: {}]
  %s4 = inlined_call_operand.hbm [shape: f32[2,16,128], index: 4, kind: output, shape index: {}]
  %s5 = sld [smem:[#allocation0]]
  $region38: #{tpu_custom_call.1} parent=0
    _
  %s7 = ssub.s32 1, %s5
  %s8 = scalar_select 0, %s7, %s5
  $region1: #{tpu_custom_call.1} parent=0
    #allocation2 [shape = 'u8[16384]{0}', space=vmem, size = 0x4000, scoped, tag = 'input window, operand 0, single buffered']
    #allocation3 [shape = 's32[1]{0}', space=sflag, size = 0x4, scoped, tag = 'scoped memory for tpu_custom_call.1']
    #allocation4 [shape = 's32[1]{0}', space=sflag, size = 0x4, scoped, tag = 'scoped memory for tpu_custom_call.1']
    #allocation5 [shape = 'u8[49152]{0}', space=vmem, size = 0xc000, scoped, tag = 'input window, operand 1, single buffered']
    #allocation6 [shape = 's32[1]{0}', space=sflag, size = 0x4, scoped, tag = 'scoped memory for tpu_custom_call.1']
    #allocation7 [shape = 'u8[98304]{0}', space=vmem, size = 0x18000, scoped, tag = 'input window, operand 2, single buffered']
    #allocation8 [shape = 'u8[16384]{0}', space=vmem, size = 0x4000, scoped, tag = 'output window, operand 0, single buffered']
    %9 = vsyncpa [#allocation3], 0
    %10 = vsyncpa [#allocation6], 0
    %11 = vsyncpa [#allocation4], 0
    // Predicated region
    $region2: #{tpu_custom_call.1} parent=1 // pred_check
      _
    $region3: #{tpu_custom_call.1} parent=1 // pred_check_branch
      %13 = sbr.rel (0) target = $region5
    $region4: #{tpu_custom_call.1} parent=1 // pred_region
      %s15 = ssub.s32 512, 512
      %16 = vsyncadd [#allocation3], %s15
      %s17 = sshll.u32 [#allocation2], 4
      %s18 = int_to_ptr.vmem [resolvable:$true] %s17
      %23 = dma.hbm_to_vmem [thread:$0]  %s0, 512, %s18, [#allocation3], 128, 128, 8
    $region5: #{tpu_custom_call.1} parent=1 // pred_fallthru
      _
    // Predicated region
    $region6: #{tpu_custom_call.1} parent=1 // pred_check
      _
    $region7: #{tpu_custom_call.1} parent=1 // pred_check_branch
      %25 = sbr.rel (0) target = $region9
    $region8: #{tpu_custom_call.1} parent=1 // pred_region
      %s27 = ssub.s32 1536, 1536
      %28 = vsyncadd [#allocation6], %s27
      %s29 = sshll.u32 [#allocation5], 4
      %s30 = int_to_ptr.vmem [resolvable:$true] %s29
      %35 = dma.hbm_to_vmem [thread:$0]  %s1, 1536, %s30, [#allocation6], 64, 64, 4
    $region9: #{tpu_custom_call.1} parent=1 // pred_fallthru
      _
    // Predicated region
    $region10: #{tpu_custom_call.1} parent=1 // pred_check
      _
    $region11: #{tpu_custom_call.1} parent=1 // pred_check_branch
      %37 = sbr.rel (0) target = $region13
    $region12: #{tpu_custom_call.1} parent=1 // pred_region
      %s39 = ssub.s32 3072, 3072
      %40 = vsyncadd [#allocation6], %s39
      %s41 = sshll.u32 [#allocation7], 4
      %s42 = int_to_ptr.vmem [resolvable:$true] %s41
      %47 = dma.hbm_to_vmem [thread:$0]  %s2, 3072, %s42, [#allocation6], 64, 64, 4
    $region13: #{tpu_custom_call.1} parent=1 // pred_fallthru
      _
    // Predicated region
    $region14: #{tpu_custom_call.1} parent=1 // pred_check
      _
    $region15: #{tpu_custom_call.1} parent=1 // pred_check_branch
      %49 = sbr.rel (0) target = $region17
    $region16: #{tpu_custom_call.1} parent=1 // pred_region
      _
    $region17: #{tpu_custom_call.1} parent=1 // pred_fallthru
      _
    // Predicated region
    $region18: #{tpu_custom_call.1} parent=1 // pred_check
      _
    $region19: #{tpu_custom_call.1} parent=1 // pred_check_branch
      %51 = sbr.rel (0) target = $region21
    $region20: #{tpu_custom_call.1} parent=1 // pred_region
      %52 = dma.done [#allocation3], 512
    $region21: #{tpu_custom_call.1} parent=1 // pred_fallthru
      _
    // Predicated region
    $region22: #{tpu_custom_call.1} parent=1 // pred_check
      _
    $region23: #{tpu_custom_call.1} parent=1 // pred_check_branch
      %54 = sbr.rel (0) target = $region25
    $region24: #{tpu_custom_call.1} parent=1 // pred_region
      %55 = dma.done [#allocation6], 1536
    $region25: #{tpu_custom_call.1} parent=1 // pred_fallthru
      _
    // Predicated region
    $region26: #{tpu_custom_call.1} parent=1 // pred_check
      _
    $region27: #{tpu_custom_call.1} parent=1 // pred_check_branch
      %57 = sbr.rel (0) target = $region29
    $region28: #{tpu_custom_call.1} parent=1 // pred_region
      %58 = dma.done [#allocation6], 3072
    $region29: #{tpu_custom_call.1} parent=1 // pred_fallthru
      _
    %v60 = vlaneseq
    %v61 = vshrl.u32 %v60, 7
    %v62 = vadd.s32 %v61, 8
    %v63 = vadd.s32 %v61, 16
    %v64 = vadd.s32 %v61, 24
    %v65 = vadd.s32 %v61, 32
    %v66 = vadd.s32 %v61, 40
    %v67 = vadd.s32 %v61, 48
    %v68 = vadd.s32 %v61, 56
    %v69 = vadd.s32 %v61, 64
    %v70 = vadd.s32 %v61, 72
    %v71 = vadd.s32 %v61, 80
    %v72 = vadd.s32 %v61, 88
    %v73 = vadd.s32 %v61, 96
    %v74 = vadd.s32 %v61, 104
    %v75 = vadd.s32 %v61, 112
    %v76 = vadd.s32 %v61, 120
    %vm77 = vcmp.lt.s32.totalorder %v61, 0
    %v78 = vsub.s32 0, %v61
    %v79 = vsel %vm77, %v78, %v61
    %v80 = vshrl.u32 %v79, 3
    %v81 = vand.u32 %v79, 7
    %v82 = vsub.s32 0, %v81
    %v83 = vsel %vm77, %v82, %v81
    %vm84 = vcmp.lt.s32.totalorder %v62, 0
    %v85 = vsub.s32 0, %v62
    %v86 = vsel %vm84, %v85, %v62
    %v87 = vshrl.u32 %v86, 3
    %v88 = vand.u32 %v86, 7
    %v89 = vsub.s32 0, %v88
    %v90 = vsel %vm84, %v89, %v88
    %vm91 = vcmp.lt.s32.totalorder %v63, 0
    %v92 = vsub.s32 0, %v63
    %v93 = vsel %vm91, %v92, %v63
    %v94 = vshrl.u32 %v93, 3
    %v95 = vand.u32 %v93, 7
    %v96 = vsub.s32 0, %v95
    %v97 = vsel %vm91, %v96, %v95
    %vm98 = vcmp.lt.s32.totalorder %v64, 0
    %v99 = vsub.s32 0, %v64
    %v100 = vsel %vm98, %v99, %v64
    %v101 = vshrl.u32 %v100, 3
    %v102 = vand.u32 %v100, 7
    %v103 = vsub.s32 0, %v102
    %v104 = vsel %vm98, %v103, %v102
    %vm105 = vcmp.lt.s32.totalorder %v65, 0
    %v106 = vsub.s32 0, %v65
    %v107 = vsel %vm105, %v106, %v65
    %v108 = vshrl.u32 %v107, 3
    %v109 = vand.u32 %v107, 7
    %v110 = vsub.s32 0, %v109
    %v111 = vsel %vm105, %v110, %v109
    %vm112 = vcmp.lt.s32.totalorder %v66, 0
    %v113 = vsub.s32 0, %v66
    %v114 = vsel %vm112, %v113, %v66
    %v115 = vshrl.u32 %v114, 3
    %v116 = vand.u32 %v114, 7
    %v117 = vsub.s32 0, %v116
    %v118 = vsel %vm112, %v117, %v116
    %vm119 = vcmp.lt.s32.totalorder %v67, 0
    %v120 = vsub.s32 0, %v67
    %v121 = vsel %vm119, %v120, %v67
    %v122 = vshrl.u32 %v121, 3
    %v123 = vand.u32 %v121, 7
    %v124 = vsub.s32 0, %v123
    %v125 = vsel %vm119, %v124, %v123
    %vm126 = vcmp.lt.s32.totalorder %v68, 0
    %v127 = vsub.s32 0, %v68
    %v128 = vsel %vm126, %v127, %v68
    %v129 = vshrl.u32 %v128, 3
    %v130 = vand.u32 %v128, 7
    %v131 = vsub.s32 0, %v130
    %v132 = vsel %vm126, %v131, %v130
    %vm133 = vcmp.lt.s32.totalorder %v69, 0
    %v134 = vsub.s32 0, %v69
    %v135 = vsel %vm133, %v134, %v69
    %v136 = vshrl.u32 %v135, 3
    %v137 = vand.u32 %v135, 7
    %v138 = vsub.s32 0, %v137
    %v139 = vsel %vm133, %v138, %v137
    %vm140 = vcmp.lt.s32.totalorder %v70, 0
    %v141 = vsub.s32 0, %v70
    %v142 = vsel %vm140, %v141, %v70
    %v143 = vshrl.u32 %v142, 3
    %v144 = vand.u32 %v142, 7
    %v145 = vsub.s32 0, %v144
    %v146 = vsel %vm140, %v145, %v144
    %vm147 = vcmp.lt.s32.totalorder %v71, 0
    %v148 = vsub.s32 0, %v71
    %v149 = vsel %vm147, %v148, %v71
    %v150 = vshrl.u32 %v149, 3
    %v151 = vand.u32 %v149, 7
    %v152 = vsub.s32 0, %v151
    %v153 = vsel %vm147, %v152, %v151
    %vm154 = vcmp.lt.s32.totalorder %v72, 0
    %v155 = vsub.s32 0, %v72
    %v156 = vsel %vm154, %v155, %v72
    %v157 = vshrl.u32 %v156, 3
    %v158 = vand.u32 %v156, 7
    %v159 = vsub.s32 0, %v158
    %v160 = vsel %vm154, %v159, %v158
    %vm161 = vcmp.lt.s32.totalorder %v73, 0
    %v162 = vsub.s32 0, %v73
    %v163 = vsel %vm161, %v162, %v73
    %v164 = vshrl.u32 %v163, 3
    %v165 = vand.u32 %v163, 7
    %v166 = vsub.s32 0, %v165
    %v167 = vsel %vm161, %v166, %v165
    %vm168 = vcmp.lt.s32.totalorder %v74, 0
    %v169 = vsub.s32 0, %v74
    %v170 = vsel %vm168, %v169, %v74
    %v171 = vshrl.u32 %v170, 3
    %v172 = vand.u32 %v170, 7
    %v173 = vsub.s32 0, %v172
    %v174 = vsel %vm168, %v173, %v172
    %vm175 = vcmp.lt.s32.totalorder %v75, 0
    %v176 = vsub.s32 0, %v75
    %v177 = vsel %vm175, %v176, %v75
    %v178 = vshrl.u32 %v177, 3
    %v179 = vand.u32 %v177, 7
    %v180 = vsub.s32 0, %v179
    %v181 = vsel %vm175, %v180, %v179
    %vm182 = vcmp.lt.s32.totalorder %v76, 0
    %v183 = vsub.s32 0, %v76
    %v184 = vsel %vm182, %v183, %v76
    %v185 = vshrl.u32 %v184, 3
    %v186 = vand.u32 %v184, 7
    %v187 = vsub.s32 0, %v186
    %v188 = vsel %vm182, %v187, %v186
    %vm189 = vcmp.ne.s32.totalorder %v83, 0
    %vm190 = vcmp.ne.s32.totalorder %v90, 0
    %vm191 = vcmp.ne.s32.totalorder %v97, 0
    %vm192 = vcmp.ne.s32.totalorder %v104, 0
    %vm193 = vcmp.ne.s32.totalorder %v111, 0
    %vm194 = vcmp.ne.s32.totalorder %v118, 0
    %vm195 = vcmp.ne.s32.totalorder %v125, 0
    %vm196 = vcmp.ne.s32.totalorder %v132, 0
    %vm197 = vcmp.ne.s32.totalorder %v139, 0
    %vm198 = vcmp.ne.s32.totalorder %v146, 0
    %vm199 = vcmp.ne.s32.totalorder %v153, 0
    %vm200 = vcmp.ne.s32.totalorder %v160, 0
    %vm201 = vcmp.ne.s32.totalorder %v167, 0
    %vm202 = vcmp.ne.s32.totalorder %v174, 0
    %vm203 = vcmp.ne.s32.totalorder %v181, 0
    %vm204 = vcmp.ne.s32.totalorder %v188, 0
    %vm205 = vcmp.lt.s32.totalorder %v83, 0
    %vm206 = vcmp.lt.s32.totalorder %v90, 0
    %vm207 = vcmp.lt.s32.totalorder %v97, 0
    %vm208 = vcmp.lt.s32.totalorder %v104, 0
    %vm209 = vcmp.lt.s32.totalorder %v111, 0
    %vm210 = vcmp.lt.s32.totalorder %v118, 0
    %vm211 = vcmp.lt.s32.totalorder %v125, 0
    %vm212 = vcmp.lt.s32.totalorder %v132, 0
    %vm213 = vcmp.lt.s32.totalorder %v139, 0
    %vm214 = vcmp.lt.s32.totalorder %v146, 0
    %vm215 = vcmp.lt.s32.totalorder %v153, 0
    %vm216 = vcmp.lt.s32.totalorder %v160, 0
    %vm217 = vcmp.lt.s32.totalorder %v167, 0
    %vm218 = vcmp.lt.s32.totalorder %v174, 0
    %vm219 = vcmp.lt.s32.totalorder %v181, 0
    %vm220 = vcmp.lt.s32.totalorder %v188, 0
    %vm221 = vmand %vm205, %vm189
    %vm222 = vmand %vm206, %vm190
    %vm223 = vmand %vm207, %vm191
    %vm224 = vmand %vm208, %vm192
    %vm225 = vmand %vm209, %vm193
    %vm226 = vmand %vm210, %vm194
    %vm227 = vmand %vm211, %vm195
    %vm228 = vmand %vm212, %vm196
    %vm229 = vmand %vm213, %vm197
    %vm230 = vmand %vm214, %vm198
    %vm231 = vmand %vm215, %vm199
    %vm232 = vmand %vm216, %vm200
    %vm233 = vmand %vm217, %vm201
    %vm234 = vmand %vm218, %vm202
    %vm235 = vmand %vm219, %vm203
    %vm236 = vmand %vm220, %vm204
    %v237 = vadd.s32 %v83, 8
    %v238 = vadd.s32 %v90, 8
    %v239 = vadd.s32 %v97, 8
    %v240 = vadd.s32 %v104, 8
    %v241 = vadd.s32 %v111, 8
    %v242 = vadd.s32 %v118, 8
    %v243 = vadd.s32 %v125, 8
    %v244 = vadd.s32 %v132, 8
    %v245 = vadd.s32 %v139, 8
    %v246 = vadd.s32 %v146, 8
    %v247 = vadd.s32 %v153, 8
    %v248 = vadd.s32 %v160, 8
    %v249 = vadd.s32 %v167, 8
    %v250 = vadd.s32 %v174, 8
    %v251 = vadd.s32 %v181, 8
    %v252 = vadd.s32 %v188, 8
    %v253 = vsel %vm221, %v237, %v83
    %v254 = vsel %vm222, %v238, %v90
    %v255 = vsel %vm223, %v239, %v97
    %v256 = vsel %vm224, %v240, %v104
    %v257 = vsel %vm225, %v241, %v111
    %v258 = vsel %vm226, %v242, %v118
    %v259 = vsel %vm227, %v243, %v125
    %v260 = vsel %vm228, %v244, %v132
    %v261 = vsel %vm229, %v245, %v139
    %v262 = vsel %vm230, %v246, %v146
    %v263 = vsel %vm231, %v247, %v153
    %v264 = vsel %vm232, %v248, %v160
    %v265 = vsel %vm233, %v249, %v167
    %v266 = vsel %vm234, %v250, %v174
    %v267 = vsel %vm235, %v251, %v181
    %v268 = vsel %vm236, %v252, %v188
    %v269 = vlaneseq
    %v270 = vand.u32 %v269, 127
    %vm271 = vcmp.lt.s32.totalorder %v270, 0
    %v272 = vsub.s32 0, %v270
    %v273 = vsel %vm271, %v272, %v270
    %v274 = vshrl.u32 %v273, 3
    %v275 = vand.u32 %v273, 7
    %v276 = vsub.s32 0, %v275
    %v277 = vsel %vm271, %v276, %v275
    %vm278 = vcmp.ne.s32.totalorder %v277, 0
    %vm279 = vcmp.lt.s32.totalorder %v277, 0
    %vm280 = vmand %vm279, %vm278
    %v281 = vadd.s32 %v277, 8
    %v282 = vsel %vm280, %v281, %v277
    %vm283 = vcmp.eq.s32.totalorder %v253, %v282
    %vm284 = vcmp.eq.s32.totalorder %v254, %v282
    %vm285 = vcmp.eq.s32.totalorder %v255, %v282
    %vm286 = vcmp.eq.s32.totalorder %v256, %v282
    %vm287 = vcmp.eq.s32.totalorder %v257, %v282
    %vm288 = vcmp.eq.s32.totalorder %v258, %v282
    %vm289 = vcmp.eq.s32.totalorder %v259, %v282
    %vm290 = vcmp.eq.s32.totalorder %v260, %v282
    %vm291 = vcmp.eq.s32.totalorder %v261, %v282
    %vm292 = vcmp.eq.s32.totalorder %v262, %v282
    %vm293 = vcmp.eq.s32.totalorder %v263, %v282
    %vm294 = vcmp.eq.s32.totalorder %v264, %v282
    %vm295 = vcmp.eq.s32.totalorder %v265, %v282
    %vm296 = vcmp.eq.s32.totalorder %v266, %v282
    %vm297 = vcmp.eq.s32.totalorder %v267, %v282
    %vm298 = vcmp.eq.s32.totalorder %v268, %v282
    %v299 = vsel %vm283, 1, 0
    %v300 = vsel %vm284, 1, 0
    %v301 = vsel %vm285, 1, 0
    %v302 = vsel %vm286, 1, 0
    %v303 = vsel %vm287, 1, 0
    %v304 = vsel %vm288, 1, 0
    %v305 = vsel %vm289, 1, 0
    %v306 = vsel %vm290, 1, 0
    %v307 = vsel %vm291, 1, 0
    %v308 = vsel %vm292, 1, 0
    %v309 = vsel %vm293, 1, 0
    %v310 = vsel %vm294, 1, 0
    %v311 = vsel %vm295, 1, 0
    %v312 = vsel %vm296, 1, 0
    %v313 = vsel %vm297, 1, 0
    %v314 = vsel %vm298, 1, 0
    %v315 = vcvt.s32.f32 %v299
    %v316 = vcvt.s32.f32 %v300
    %v317 = vcvt.s32.f32 %v301
    %v318 = vcvt.s32.f32 %v302
    %v319 = vcvt.s32.f32 %v303
    %v320 = vcvt.s32.f32 %v304
    %v321 = vcvt.s32.f32 %v305
    %v322 = vcvt.s32.f32 %v306
    %v323 = vcvt.s32.f32 %v307
    %v324 = vcvt.s32.f32 %v308
    %v325 = vcvt.s32.f32 %v309
    %v326 = vcvt.s32.f32 %v310
    %v327 = vcvt.s32.f32 %v311
    %v328 = vcvt.s32.f32 %v312
    %v329 = vcvt.s32.f32 %v313
    %v330 = vcvt.s32.f32 %v314
    %v331 = vld [vmem:[#allocation2] sm:$0xff]
    %v332 = vld [vmem:[#allocation2 + $0x8] sm:$0xff]
    %v333 = vld [vmem:[#allocation2 + $0x10] sm:$0xff]
    %v334 = vld [vmem:[#allocation2 + $0x18] sm:$0xff]
    %vm335 = vcmp.lt.s32.totalorder %v61, 0
    %v336 = vsub.s32 0, %v61
    %v337 = vsel %vm335, %v336, %v61
    %v338 = vshrl.u32 %v337, 4
    %v339 = vand.u32 %v337, 15
    %v340 = vsub.s32 0, %v339
    %v341 = vsel %vm335, %v340, %v339
    %vm342 = vcmp.lt.s32.totalorder %v62, 0
    %v343 = vsub.s32 0, %v62
    %v344 = vsel %vm342, %v343, %v62
    %v345 = vshrl.u32 %v344, 4
    %v346 = vand.u32 %v344, 15
    %v347 = vsub.s32 0, %v346
    %v348 = vsel %vm342, %v347, %v346
    %vm349 = vcmp.lt.s32.totalorder %v63, 0
    %v350 = vsub.s32 0, %v63
    %v351 = vsel %vm349, %v350, %v63
    %v352 = vshrl.u32 %v351, 4
    %v353 = vand.u32 %v351, 15
    %v354 = vsub.s32 0, %v353
    %v355 = vsel %vm349, %v354, %v353
    %vm356 = vcmp.lt.s32.totalorder %v64, 0
    %v357 = vsub.s32 0, %v64
    %v358 = vsel %vm356, %v357, %v64
    %v359 = vshrl.u32 %v358, 4
    %v360 = vand.u32 %v358, 15
    %v361 = vsub.s32 0, %v360
    %v362 = vsel %vm356, %v361, %v360
    %vm363 = vcmp.ne.s32.totalorder %v341, 0
    %vm364 = vcmp.ne.s32.totalorder %v348, 0
    %vm365 = vcmp.ne.s32.totalorder %v355, 0
    %vm366 = vcmp.ne.s32.totalorder %v362, 0
    %vm367 = vcmp.lt.s32.totalorder %v341, 0
    %vm368 = vcmp.lt.s32.totalorder %v348, 0
    %vm369 = vcmp.lt.s32.totalorder %v355, 0
    %vm370 = vcmp.lt.s32.totalorder %v362, 0
    %vm371 = vmand %vm367, %vm363
    %vm372 = vmand %vm368, %vm364
    %vm373 = vmand %vm369, %vm365
    %vm374 = vmand %vm370, %vm366
    %v375 = vadd.s32 %v341, 16
    %v376 = vadd.s32 %v348, 16
    %v377 = vadd.s32 %v355, 16
    %v378 = vadd.s32 %v362, 16
    %v379 = vsel %vm371, %v375, %v341
    %v380 = vsel %vm372, %v376, %v348
    %v381 = vsel %vm373, %v377, %v355
    %v382 = vsel %vm374, %v378, %v362
    %vm383 = vcmp.eq.s32.totalorder %v379, 0
    %vm384 = vcmp.eq.s32.totalorder %v380, 0
    %vm385 = vcmp.eq.s32.totalorder %v381, 0
    %vm386 = vcmp.eq.s32.totalorder %v382, 0
    %v387 = vrot.slane %v331, 7
    %v388 = vrot.slane %v332, 7
    %v389 = vrot.slane %v333, 7
    %v390 = vrot.slane %v334, 7
    %vm391 = vcmp.lt.s32.totalorder %v61, 1
    %v392 = vsel %vm391, %v389, %v390
    %v393 = vsel %vm391, %v388, %v389
    %v394 = vsel %vm391, %v387, %v388
    %v395 = vsel %vm391, %v390, %v387
    %v396 = vsel %vm383, 0.0, %v395
    %v397 = vsel %vm384, 0.0, %v394
    %v398 = vsel %vm385, 0.0, %v393
    %v399 = vsel %vm386, 0.0, %v392
    %vm400 = vcmp.eq.s32.totalorder %v379, 15
    %vm401 = vcmp.eq.s32.totalorder %v380, 15
    %vm402 = vcmp.eq.s32.totalorder %v381, 15
    %vm403 = vcmp.eq.s32.totalorder %v382, 15
    %v404 = vrot.slane %v331, 1
    %v405 = vrot.slane %v332, 1
    %v406 = vrot.slane %v333, 1
    %v407 = vrot.slane %v334, 1
    %vm408 = vcmp.lt.s32.totalorder %v61, 7
    %v409 = vsel %vm408, %v406, %v407
    %v410 = vsel %vm408, %v405, %v406
    %v411 = vsel %vm408, %v404, %v405
    %v412 = vsel %vm408, %v407, %v404
    %v413 = vsel %vm400, 0.0, %v411
    %v414 = vsel %vm401, 0.0, %v410
    %v415 = vsel %vm402, 0.0, %v409
    %v416 = vsel %vm403, 0.0, %v412
    %421 = vrot.lane.b32.xlu0 %v331, 64
    %v422 = vpop.permute.xlu0 %421
    %423 = vrot.lane.b32.xlu0 %v332, 64
    %v424 = vpop.permute.xlu0 %423
    %425 = vrot.lane.b32.xlu0 %v333, 64
    %v426 = vpop.permute.xlu0 %425
    %427 = vrot.lane.b32.xlu0 %v334, 64
    %v428 = vpop.permute.xlu0 %427
    %vm433 = vcmask 523264
    %v434 = vsel %vm433, %v396, %v422
    %v435 = vsel %vm433, %v397, %v424
    %v436 = vsel %vm433, %v398, %v426
    %v437 = vsel %vm433, %v399, %v428
    %v438 = vpack.c.bf16 %v435, %v434
    %v439 = vpack.c.bf16 %v414, %v413
    %v440 = vpack.c.bf16 %v437, %v436
    %v441 = vpack.c.bf16 %v416, %v415
    %v442 = vld [vmem:[#allocation5] sm:$0xf]
    %v443 = vld [vmem:[#allocation5 + $0x4] sm:$0xf]
    %v444 = vld [vmem:[#allocation5 + $0x8] sm:$0xf]
    %v445 = vld [vmem:[#allocation5 + $0xc] sm:$0xf]
    %v446 = vld [vmem:[#allocation5 + $0x10] sm:$0xf]
    %v447 = vld [vmem:[#allocation5 + $0x14] sm:$0xf]
    %v448 = vld [vmem:[#allocation5 + $0x18] sm:$0xf]
    %v449 = vld [vmem:[#allocation5 + $0x1c] sm:$0xf]
    %v450 = vld [vmem:[#allocation5 + $0x20] sm:$0xf]
    %v451 = vld [vmem:[#allocation5 + $0x24] sm:$0xf]
    %v452 = vld [vmem:[#allocation5 + $0x28] sm:$0xf]
    %v453 = vld [vmem:[#allocation5 + $0x2c] sm:$0xf]
    %v454 = vld [vmem:[#allocation5 + $0x30] sm:$0xf]
    %v455 = vld [vmem:[#allocation5 + $0x34] sm:$0xf]
    %v456 = vld [vmem:[#allocation5 + $0x38] sm:$0xf]
    %v457 = vld [vmem:[#allocation5 + $0x3c] sm:$0xf]
    %v458 = vld [vmem:[#allocation5 + $0x40] sm:$0xf]
    %v459 = vld [vmem:[#allocation5 + $0x44] sm:$0xf]
    %v460 = vld [vmem:[#allocation5 + $0x48] sm:$0xf]
    %v461 = vld [vmem:[#allocation5 + $0x4c] sm:$0xf]
    %v462 = vld [vmem:[#allocation5 + $0x50] sm:$0xf]
    %v463 = vld [vmem:[#allocation5 + $0x54] sm:$0xf]
    %v464 = vld [vmem:[#allocation5 + $0x58] sm:$0xf]
    %v465 = vld [vmem:[#allocation5 + $0x5c] sm:$0xf]
    %v490 = vunpack.c.l.b16 %v442
    %v491 = vunpack.c.l.b16 %v443
    %v492 = vunpack.c.l.b16 %v444
    %v493 = vunpack.c.l.b16 %v445
    %v494 = vunpack.c.l.b16 %v446
    %v495 = vunpack.c.l.b16 %v447
    %v496 = vunpack.c.l.b16 %v448
    %v497 = vunpack.c.l.b16 %v449
    %v498 = vunpack.c.l.b16 %v450
    %v499 = vunpack.c.l.b16 %v451
    %v500 = vunpack.c.l.b16 %v452
    %v501 = vunpack.c.l.b16 %v453
    %v502 = vunpack.c.l.b16 %v454
    %v503 = vunpack.c.l.b16 %v455
    %v504 = vunpack.c.l.b16 %v456
    %v505 = vunpack.c.l.b16 %v457
    %v506 = vunpack.c.l.b16 %v458
    %v507 = vunpack.c.l.b16 %v459
    %v508 = vunpack.c.l.b16 %v460
    %v509 = vunpack.c.l.b16 %v461
    %v510 = vunpack.c.l.b16 %v462
    %v511 = vunpack.c.l.b16 %v463
    %v512 = vunpack.c.l.b16 %v464
    %v513 = vunpack.c.l.b16 %v465
    %v514 = vpack.c.b16 %v491, %v490
    %v515 = vpack.c.b16 %v493, %v492
    %v516 = vpack.c.b16 %v495, %v494
    %v517 = vpack.c.b16 %v497, %v496
    %v518 = vpack.c.b16 %v499, %v498
    %v519 = vpack.c.b16 %v501, %v500
    %v520 = vpack.c.b16 %v503, %v502
    %v521 = vpack.c.b16 %v505, %v504
    %v522 = vpack.c.b16 %v507, %v506
    %v523 = vpack.c.b16 %v509, %v508
    %v524 = vpack.c.b16 %v511, %v510
    %v525 = vpack.c.b16 %v513, %v512
    %v539 = vsel %vm433, %v439, 0
    %v542 = vsel %vm433, %v441, 0
    %544 = vmatprep.subr.bf16.mxu0 0
    %545 = vmatpush1.bf16.msra.mxu0 %v521
    %546 = vmatprep.subr.bf16.mxu0 0
    %547 = vmatpush1.bf16.msra.mxu0 %v520
    %548 = vmatprep.subr.bf16.mxu0 0
    %549 = vmatpush1.bf16.msra.mxu0 %v519
    %550 = vmatprep.subr.bf16.mxu0 0
    %551 = vmatpush1.bf16.msra.mxu0 %v518
    %552 = vmatprep.subr.bf16.mxu0 0
    %553 = vmatpush1.bf16.msra.mxu0 %v517
    %554 = vmatprep.subr.bf16.mxu0 0
    %555 = vmatpush1.bf16.msra.mxu0 %v516
    %556 = vmatprep.subr.bf16.mxu0 0
    %557 = vmatpush1.bf16.msra.mxu0 %v515
    %558 = vmatprep.subr.bf16.mxu0 0
    %559 = vmatpush1.bf16.msra.mxu0 %v514
    %560 = vmatprep.subr.bf16.mxu0 0
    %561 = vmatpush2.bf16.msra.mxu0 0
    %562 = vmatprep.subr.bf16.mxu0 0
    %563 = vmatpush2.bf16.msra.mxu0 0
    %564 = vmatprep.subr.bf16.mxu0 0
    %565 = vmatpush2.bf16.msra.mxu0 0
    %566 = vmatprep.subr.bf16.mxu0 0
    %567 = vmatpush2.bf16.msra.mxu0 0
    %568 = vmatprep.subr.bf16.mxu0 0
    %569 = vmatpush2.bf16.msra.mxu0 %v525
    %570 = vmatprep.subr.bf16.mxu0 0
    %571 = vmatpush2.bf16.msra.mxu0 %v524
    %572 = vmatprep.subr.bf16.mxu0 0
    %573 = vmatpush2.bf16.msra.mxu0 %v523
    %574 = vmatprep.subr.bf16.mxu0 0
    %575 = vmatpush2.bf16.msra.mxu0 %v522
    %576 = vmatprep.mubr.bf16.mxu0 %v539
    %577 = vmatmul.mubr.bf16.gmra.mxu0 %v438
    %v578 = vpop.f32.mrf.mxu0
    %v579 = vadd.f32 0.0, %v578
    %v580 = vpop.f32.mrf.mxu0
    %v581 = vpop.f32.mrf.mxu0
    %v582 = vadd.f32 0.0, %v581
    %v583 = vpop.f32.mrf.mxu0
    %584 = vmatprep.mubr.bf16.mxu0 %v542
    %585 = vmatmul.mubr.bf16.gmra.mxu0 %v440
    %v586 = vpop.f32.mrf.mxu0
    %v587 = vadd.f32 0.0, %v586
    %v588 = vpop.f32.mrf.mxu0
    %v589 = vpop.f32.mrf.mxu0
    %v590 = vadd.f32 0.0, %v589
    %v591 = vpop.f32.mrf.mxu0
    %592 = vdwg.mxu0
    %v593 = vld [vmem:[%s3] sm:$0x1]
    %v594 = vld [vmem:[%s3 + $0x1] sm:$0x1]
    %v595 = vadd.f32 %v579, %v582
    %v596 = vadd.f32 %v595, %v587
    %v597 = vadd.f32 %v596, %v590
    %v598 = vrot.slane %v597, 4
    %v599 = vadd.f32 %v597, %v598
    %v600 = vrot.slane %v599, 2
    %v601 = vadd.f32 %v599, %v600
    %v602 = vrot.slane %v601, 1
    %v603 = vadd.f32 %v601, %v602
    %v604 = vmul.f32 %v579, %v579
    %v605 = vmul.f32 %v582, %v582
    %v606 = vmul.f32 %v587, %v587
    %v607 = vmul.f32 %v590, %v590
    %v608 = vadd.f32 %v604, %v605
    %v609 = vadd.f32 %v608, %v606
    %v610 = vadd.f32 %v609, %v607
    %v611 = vrot.slane %v610, 4
    %v612 = vadd.f32 %v610, %v611
    %v613 = vrot.slane %v612, 2
    %v614 = vadd.f32 %v612, %v613
    %v615 = vrot.slane %v614, 1
    %v616 = vadd.f32 %v614, %v615
    %vm617 = vcmask 1040384
    %v618 = vsel %vm617, %v603, %v616
    %619 = vmatprep.subr.mxu0 0.0
    %620 = vmatpush1.msra.mxu0 %v330
    %621 = vmatprep.subr.mxu0 0.0
    %622 = vmatpush1.msra.mxu0 %v329
    %623 = vmatprep.subr.mxu0 0.0
    %624 = vmatpush1.msra.mxu0 %v328
    %625 = vmatprep.subr.mxu0 0.0
    %626 = vmatpush1.msra.mxu0 %v327
    %627 = vmatprep.subr.mxu0 0.0
    %628 = vmatpush1.msra.mxu0 %v326
    %629 = vmatprep.subr.mxu0 0.0
    %630 = vmatpush1.msra.mxu0 %v325
    %631 = vmatprep.subr.mxu0 0.0
    %632 = vmatpush1.msra.mxu0 %v324
    %633 = vmatprep.subr.mxu0 0.0
    %634 = vmatpush1.msra.mxu0 %v323
    %635 = vmatprep.subr.mxu0 0.0
    %636 = vmatpush1.msra.mxu0 %v322
    %637 = vmatprep.subr.mxu0 0.0
    %638 = vmatpush1.msra.mxu0 %v321
    %639 = vmatprep.subr.mxu0 0.0
    %640 = vmatpush1.msra.mxu0 %v320
    %641 = vmatprep.subr.mxu0 0.0
    %642 = vmatpush1.msra.mxu0 %v319
    %643 = vmatprep.subr.mxu0 0.0
    %644 = vmatpush1.msra.mxu0 %v318
    %645 = vmatprep.subr.mxu0 0.0
    %646 = vmatpush1.msra.mxu0 %v317
    %647 = vmatprep.subr.mxu0 0.0
    %648 = vmatpush1.msra.mxu0 %v316
    %649 = vmatprep.subr.mxu0 0.0
    %650 = vmatpush1.msra.mxu0 %v315
    %651 = vmatprep.subr.mxu0 0.0
    %652 = vmatpush2.msra.mxu0 0.0
    %653 = vmatprep.subr.mxu0 0.0
    %654 = vmatpush2.msra.mxu0 0.0
    %655 = vmatprep.subr.mxu0 0.0
    %656 = vmatpush2.msra.mxu0 0.0
    %657 = vmatprep.subr.mxu0 0.0
    %658 = vmatpush2.msra.mxu0 0.0
    %659 = vmatprep.subr.mxu0 0.0
    %660 = vmatpush2.msra.mxu0 0.0
    %661 = vmatprep.subr.mxu0 0.0
    %662 = vmatpush2.msra.mxu0 0.0
    %663 = vmatprep.subr.mxu0 0.0
    %664 = vmatpush2.msra.mxu0 0.0
    %665 = vmatprep.subr.mxu0 0.0
    %666 = vmatpush2.msra.mxu0 0.0
    %667 = vmatprep.subr.mxu0 0.0
    %668 = vmatpush2.msra.mxu0 0.0
    %669 = vmatprep.subr.mxu0 0.0
    %670 = vmatpush2.msra.mxu0 0.0
    %671 = vmatprep.subr.mxu0 0.0
    %672 = vmatpush2.msra.mxu0 0.0
    %673 = vmatprep.subr.mxu0 0.0
    %674 = vmatpush2.msra.mxu0 0.0
    %675 = vmatprep.subr.mxu0 0.0
    %676 = vmatpush2.msra.mxu0 0.0
    %677 = vmatprep.subr.mxu0 0.0
    %678 = vmatpush2.msra.mxu0 0.0
    %679 = vmatprep.subr.mxu0 0.0
    %680 = vmatpush2.msra.mxu0 0.0
    %681 = vmatprep.subr.mxu0 0.0
    %682 = vmatpush2.msra.mxu0 0.0
    %683 = vmatprep.mubr.f32.mxu0 0.0
    %684 = vmatmul.mubr.f32.gmra.mxu0 %v618
    %v685 = vpop.f32.mrf.mxu0
    %v686 = vadd.f32 0.0, %v685
    %v687 = vpop.f32.mrf.mxu0
    %688 = vdwg.mxu0
    %v689 = vmul.f32 %v686, 0.001953125
    %v690 = vmul.f32 %v689, %v689
    %v692 = vrot.slane %v690, 7
    %v694 = vsub.f32 %v689, %v692
    %v695 = vadd.f32 %v694, 1e-05
    %v696 = vrsqrt.pop %v695
    %v698 = vrot.slane %v696, 1
    %v700 = vmul.f32 %v593, %v698
    %v701 = vmul.f32 %v689, %v700
    %v702 = vsub.f32 %v594, %v701
    %v703 = vlaneseq
    %v704 = vshrl.u32 %v703, 7
    %v705 = vsub.s32 0, %v704
    %v706 = vrot.slane %v700, %v705
    %v707 = vmul.f32 %v579, %v706
    %v708 = vmul.f32 %v582, %v706
    %v709 = vmul.f32 %v587, %v706
    %v710 = vmul.f32 %v590, %v706
    %v711 = vlaneseq
    %v712 = vshrl.u32 %v711, 7
    %v713 = vsub.s32 0, %v712
    %v714 = vrot.slane %v702, %v713
    %v715 = vadd.f32 %v707, %v714
    %v716 = vadd.f32 %v708, %v714
    %v717 = vadd.f32 %v709, %v714
    %v718 = vadd.f32 %v710, %v714
    %v719 = vmax.f32 %v715, 0.0
    %v720 = vmax.f32 %v716, 0.0
    %v721 = vmax.f32 %v717, 0.0
    %v722 = vmax.f32 %v718, 0.0
    %v723 = vrot.slane %v719, 7
    %v724 = vrot.slane %v720, 7
    %v725 = vrot.slane %v721, 7
    %v726 = vrot.slane %v722, 7
    %v727 = vsel %vm391, %v725, %v726
    %v728 = vsel %vm391, %v724, %v725
    %v729 = vsel %vm391, %v723, %v724
    %v730 = vsel %vm391, %v726, %v723
    %v731 = vsel %vm383, 0.0, %v730
    %v732 = vsel %vm384, 0.0, %v729
    %v733 = vsel %vm385, 0.0, %v728
    %v734 = vsel %vm386, 0.0, %v727
    %v735 = vrot.slane %v719, 1
    %v736 = vrot.slane %v720, 1
    %v737 = vrot.slane %v721, 1
    %v738 = vrot.slane %v722, 1
    %v739 = vsel %vm408, %v737, %v738
    %v740 = vsel %vm408, %v736, %v737
    %v741 = vsel %vm408, %v735, %v736
    %v742 = vsel %vm408, %v738, %v735
    %v743 = vsel %vm400, 0.0, %v741
    %v744 = vsel %vm401, 0.0, %v740
    %v745 = vsel %vm402, 0.0, %v739
    %v746 = vsel %vm403, 0.0, %v742
    %v747 = vpack.c.bf16 %v732, %v731
    %v748 = vpack.c.bf16 %v720, %v719
    %v749 = vpack.c.bf16 %v744, %v743
    %v750 = vpack.c.bf16 %v734, %v733
    %v751 = vpack.c.bf16 %v722, %v721
    %v752 = vpack.c.bf16 %v746, %v745
    %v753 = vld [vmem:[#allocation7] sm:$0xf]
    %v754 = vld [vmem:[#allocation7 + $0x4] sm:$0xf]
    %v755 = vld [vmem:[#allocation7 + $0x8] sm:$0xf]
    %v756 = vld [vmem:[#allocation7 + $0xc] sm:$0xf]
    %v757 = vld [vmem:[#allocation7 + $0x10] sm:$0xf]
    %v758 = vld [vmem:[#allocation7 + $0x14] sm:$0xf]
    %v759 = vld [vmem:[#allocation7 + $0x18] sm:$0xf]
    %v760 = vld [vmem:[#allocation7 + $0x1c] sm:$0xf]
    %v761 = vld [vmem:[#allocation7 + $0x20] sm:$0xf]
    %v762 = vld [vmem:[#allocation7 + $0x24] sm:$0xf]
    %v763 = vld [vmem:[#allocation7 + $0x28] sm:$0xf]
    %v764 = vld [vmem:[#allocation7 + $0x2c] sm:$0xf]
    %v765 = vld [vmem:[#allocation7 + $0x30] sm:$0xf]
    %v766 = vld [vmem:[#allocation7 + $0x34] sm:$0xf]
    %v767 = vld [vmem:[#allocation7 + $0x38] sm:$0xf]
    %v768 = vld [vmem:[#allocation7 + $0x3c] sm:$0xf]
    %v769 = vld [vmem:[#allocation7 + $0x40] sm:$0xf]
    %v770 = vld [vmem:[#allocation7 + $0x44] sm:$0xf]
    %v771 = vld [vmem:[#allocation7 + $0x48] sm:$0xf]
    %v772 = vld [vmem:[#allocation7 + $0x4c] sm:$0xf]
    %v773 = vld [vmem:[#allocation7 + $0x50] sm:$0xf]
    %v774 = vld [vmem:[#allocation7 + $0x54] sm:$0xf]
    %v775 = vld [vmem:[#allocation7 + $0x58] sm:$0xf]
    %v776 = vld [vmem:[#allocation7 + $0x5c] sm:$0xf]
    %v777 = vld [vmem:[#allocation7 + $0x60] sm:$0xf]
    %v778 = vld [vmem:[#allocation7 + $0x64] sm:$0xf]
    %v779 = vld [vmem:[#allocation7 + $0x68] sm:$0xf]
    %v780 = vld [vmem:[#allocation7 + $0x6c] sm:$0xf]
    %v781 = vld [vmem:[#allocation7 + $0x70] sm:$0xf]
    %v782 = vld [vmem:[#allocation7 + $0x74] sm:$0xf]
    %v783 = vld [vmem:[#allocation7 + $0x78] sm:$0xf]
    %v784 = vld [vmem:[#allocation7 + $0x7c] sm:$0xf]
    %v785 = vld [vmem:[#allocation7 + $0x80] sm:$0xf]
    %v786 = vld [vmem:[#allocation7 + $0x84] sm:$0xf]
    %v787 = vld [vmem:[#allocation7 + $0x88] sm:$0xf]
    %v788 = vld [vmem:[#allocation7 + $0x8c] sm:$0xf]
    %v789 = vld [vmem:[#allocation7 + $0x90] sm:$0xf]
    %v790 = vld [vmem:[#allocation7 + $0x94] sm:$0xf]
    %v791 = vld [vmem:[#allocation7 + $0x98] sm:$0xf]
    %v792 = vld [vmem:[#allocation7 + $0x9c] sm:$0xf]
    %v793 = vld [vmem:[#allocation7 + $0xa0] sm:$0xf]
    %v794 = vld [vmem:[#allocation7 + $0xa4] sm:$0xf]
    %v795 = vld [vmem:[#allocation7 + $0xa8] sm:$0xf]
    %v796 = vld [vmem:[#allocation7 + $0xac] sm:$0xf]
    %v797 = vld [vmem:[#allocation7 + $0xb0] sm:$0xf]
    %v798 = vld [vmem:[#allocation7 + $0xb4] sm:$0xf]
    %v799 = vld [vmem:[#allocation7 + $0xb8] sm:$0xf]
    %v800 = vld [vmem:[#allocation7 + $0xbc] sm:$0xf]
    %v849 = vunpack.c.l.b16 %v753
    %v850 = vunpack.c.l.b16 %v754
    %v851 = vunpack.c.l.b16 %v755
    %v852 = vunpack.c.l.b16 %v756
    %v853 = vunpack.c.l.b16 %v757
    %v854 = vunpack.c.l.b16 %v758
    %v855 = vunpack.c.l.b16 %v759
    %v856 = vunpack.c.l.b16 %v760
    %v857 = vunpack.c.l.b16 %v761
    %v858 = vunpack.c.l.b16 %v762
    %v859 = vunpack.c.l.b16 %v763
    %v860 = vunpack.c.l.b16 %v764
    %v861 = vunpack.c.l.b16 %v765
    %v862 = vunpack.c.l.b16 %v766
    %v863 = vunpack.c.l.b16 %v767
    %v864 = vunpack.c.l.b16 %v768
    %v865 = vunpack.c.l.b16 %v769
    %v866 = vunpack.c.l.b16 %v770
    %v867 = vunpack.c.l.b16 %v771
    %v868 = vunpack.c.l.b16 %v772
    %v869 = vunpack.c.l.b16 %v773
    %v870 = vunpack.c.l.b16 %v774
    %v871 = vunpack.c.l.b16 %v775
    %v872 = vunpack.c.l.b16 %v776
    %v873 = vunpack.c.l.b16 %v777
    %v874 = vunpack.c.l.b16 %v778
    %v875 = vunpack.c.l.b16 %v779
    %v876 = vunpack.c.l.b16 %v780
    %v877 = vunpack.c.l.b16 %v781
    %v878 = vunpack.c.l.b16 %v782
    %v879 = vunpack.c.l.b16 %v783
    %v880 = vunpack.c.l.b16 %v784
    %v881 = vunpack.c.l.b16 %v785
    %v882 = vunpack.c.l.b16 %v786
    %v883 = vunpack.c.l.b16 %v787
    %v884 = vunpack.c.l.b16 %v788
    %v885 = vunpack.c.l.b16 %v789
    %v886 = vunpack.c.l.b16 %v790
    %v887 = vunpack.c.l.b16 %v791
    %v888 = vunpack.c.l.b16 %v792
    %v889 = vunpack.c.l.b16 %v793
    %v890 = vunpack.c.l.b16 %v794
    %v891 = vunpack.c.l.b16 %v795
    %v892 = vunpack.c.l.b16 %v796
    %v893 = vunpack.c.l.b16 %v797
    %v894 = vunpack.c.l.b16 %v798
    %v895 = vunpack.c.l.b16 %v799
    %v896 = vunpack.c.l.b16 %v800
    %v897 = vpack.c.b16 %v850, %v849
    %v898 = vpack.c.b16 %v852, %v851
    %v899 = vpack.c.b16 %v854, %v853
    %v900 = vpack.c.b16 %v856, %v855
    %v901 = vpack.c.b16 %v858, %v857
    %v902 = vpack.c.b16 %v860, %v859
    %v903 = vpack.c.b16 %v862, %v861
    %v904 = vpack.c.b16 %v864, %v863
    %v905 = vpack.c.b16 %v866, %v865
    %v906 = vpack.c.b16 %v868, %v867
    %v907 = vpack.c.b16 %v870, %v869
    %v908 = vpack.c.b16 %v872, %v871
    %v909 = vpack.c.b16 %v874, %v873
    %v910 = vpack.c.b16 %v876, %v875
    %v911 = vpack.c.b16 %v878, %v877
    %v912 = vpack.c.b16 %v880, %v879
    %v913 = vpack.c.b16 %v882, %v881
    %v914 = vpack.c.b16 %v884, %v883
    %v915 = vpack.c.b16 %v886, %v885
    %v916 = vpack.c.b16 %v888, %v887
    %v917 = vpack.c.b16 %v890, %v889
    %v918 = vpack.c.b16 %v892, %v891
    %v919 = vpack.c.b16 %v894, %v893
    %v920 = vpack.c.b16 %v896, %v895
    %945 = vmatprep.subr.bf16.mxu0 0
    %946 = vmatpush1.bf16.msra.mxu0 %v904
    %947 = vmatprep.subr.bf16.mxu0 0
    %948 = vmatpush1.bf16.msra.mxu0 %v903
    %949 = vmatprep.subr.bf16.mxu0 0
    %950 = vmatpush1.bf16.msra.mxu0 %v902
    %951 = vmatprep.subr.bf16.mxu0 0
    %952 = vmatpush1.bf16.msra.mxu0 %v901
    %953 = vmatprep.subr.bf16.mxu0 0
    %954 = vmatpush1.bf16.msra.mxu0 %v900
    %955 = vmatprep.subr.bf16.mxu0 0
    %956 = vmatpush1.bf16.msra.mxu0 %v899
    %957 = vmatprep.subr.bf16.mxu0 0
    %958 = vmatpush1.bf16.msra.mxu0 %v898
    %959 = vmatprep.subr.bf16.mxu0 0
    %960 = vmatpush1.bf16.msra.mxu0 %v897
    %961 = vmatprep.subr.bf16.mxu0 0
    %962 = vmatpush2.bf16.msra.mxu0 %v912
    %963 = vmatprep.subr.bf16.mxu0 0
    %964 = vmatpush2.bf16.msra.mxu0 %v911
    %965 = vmatprep.subr.bf16.mxu0 0
    %966 = vmatpush2.bf16.msra.mxu0 %v910
    %967 = vmatprep.subr.bf16.mxu0 0
    %968 = vmatpush2.bf16.msra.mxu0 %v909
    %969 = vmatprep.subr.bf16.mxu0 0
    %970 = vmatpush2.bf16.msra.mxu0 %v908
    %971 = vmatprep.subr.bf16.mxu0 0
    %972 = vmatpush2.bf16.msra.mxu0 %v907
    %973 = vmatprep.subr.bf16.mxu0 0
    %974 = vmatpush2.bf16.msra.mxu0 %v906
    %975 = vmatprep.subr.bf16.mxu0 0
    %976 = vmatpush2.bf16.msra.mxu0 %v905
    %977 = vmatprep.mubr.bf16.mxu0 %v748
    %978 = vmatmul.mubr.bf16.gmra.mxu0 %v747
    %v979 = vpop.f32.mrf.mxu0
    %v980 = vadd.f32 0.0, %v979
    %v981 = vpop.f32.mrf.mxu0
    %v982 = vpop.f32.mrf.mxu0
    %v983 = vadd.f32 0.0, %v982
    %v984 = vpop.f32.mrf.mxu0
    %985 = vmatprep.mubr.bf16.mxu0 %v751
    %986 = vmatmul.mubr.bf16.gmra.mxu0 %v750
    %v987 = vpop.f32.mrf.mxu0
    %v988 = vadd.f32 0.0, %v987
    %v989 = vpop.f32.mrf.mxu0
    %v990 = vpop.f32.mrf.mxu0
    %v991 = vadd.f32 0.0, %v990
    %v992 = vpop.f32.mrf.mxu0
    %993 = vdwg.mxu0
    %994 = vmatprep.subr.bf16.mxu0 0
    %995 = vmatpush1.bf16.msra.mxu0 %v920
    %996 = vmatprep.subr.bf16.mxu0 0
    %997 = vmatpush1.bf16.msra.mxu0 %v919
    %998 = vmatprep.subr.bf16.mxu0 0
    %999 = vmatpush1.bf16.msra.mxu0 %v918
    %1000 = vmatprep.subr.bf16.mxu0 0
    %1001 = vmatpush1.bf16.msra.mxu0 %v917
    %1002 = vmatprep.subr.bf16.mxu0 0
    %1003 = vmatpush1.bf16.msra.mxu0 %v916
    %1004 = vmatprep.subr.bf16.mxu0 0
    %1005 = vmatpush1.bf16.msra.mxu0 %v915
    %1006 = vmatprep.subr.bf16.mxu0 0
    %1007 = vmatpush1.bf16.msra.mxu0 %v914
    %1008 = vmatprep.subr.bf16.mxu0 0
    %1009 = vmatpush1.bf16.msra.mxu0 %v913
    %1010 = vmatprep.subr.bf16.mxu0 0
    %1011 = vmatpush2.bf16.msra.mxu0 0
    %1012 = vmatprep.subr.bf16.mxu0 0
    %1013 = vmatpush2.bf16.msra.mxu0 0
    %1014 = vmatprep.subr.bf16.mxu0 0
    %1015 = vmatpush2.bf16.msra.mxu0 0
    %1016 = vmatprep.subr.bf16.mxu0 0
    %1017 = vmatpush2.bf16.msra.mxu0 0
    %1018 = vmatprep.subr.bf16.mxu0 0
    %1019 = vmatpush2.bf16.msra.mxu0 0
    %1020 = vmatprep.subr.bf16.mxu0 0
    %1021 = vmatpush2.bf16.msra.mxu0 0
    %1022 = vmatprep.subr.bf16.mxu0 0
    %1023 = vmatpush2.bf16.msra.mxu0 0
    %1024 = vmatprep.subr.bf16.mxu0 0
    %1025 = vmatpush2.bf16.msra.mxu0 0
    %1026 = vmatprep.mubr.bf16.mxu0 0
    %1027 = vmatmul.mubr.bf16.gmra.mxu0 %v749
    %v1028 = vpop.f32.mrf.mxu0
    %v1029 = vadd.f32 %v980, %v1028
    %v1030 = vpop.f32.mrf.mxu0
    %v1031 = vpop.f32.mrf.mxu0
    %v1032 = vadd.f32 %v983, %v1031
    %v1033 = vpop.f32.mrf.mxu0
    %1034 = vmatprep.mubr.bf16.mxu0 0
    %1035 = vmatmul.mubr.bf16.gmra.mxu0 %v752
    %v1036 = vpop.f32.mrf.mxu0
    %v1037 = vadd.f32 %v988, %v1036
    %v1038 = vpop.f32.mrf.mxu0
    %v1039 = vpop.f32.mrf.mxu0
    %v1040 = vadd.f32 %v991, %v1039
    %v1041 = vpop.f32.mrf.mxu0
    %1042 = vdwg.mxu0
    %v1043 = vld [vmem:[%s3 + $0x2] sm:$0x1]
    %v1044 = vld [vmem:[%s3 + $0x3] sm:$0x1]
    %v1045 = vadd.f32 %v1029, %v1032
    %v1046 = vadd.f32 %v1045, %v1037
    %v1047 = vadd.f32 %v1046, %v1040
    %v1048 = vrot.slane %v1047, 4
    %v1049 = vadd.f32 %v1047, %v1048
    %v1050 = vrot.slane %v1049, 2
    %v1051 = vadd.f32 %v1049, %v1050
    %v1052 = vrot.slane %v1051, 1
    %v1053 = vadd.f32 %v1051, %v1052
    %v1054 = vmul.f32 %v1029, %v1029
    %v1055 = vmul.f32 %v1032, %v1032
    %v1056 = vmul.f32 %v1037, %v1037
    %v1057 = vmul.f32 %v1040, %v1040
    %v1058 = vadd.f32 %v1054, %v1055
    %v1059 = vadd.f32 %v1058, %v1056
    %v1060 = vadd.f32 %v1059, %v1057
    %v1061 = vrot.slane %v1060, 4
    %v1062 = vadd.f32 %v1060, %v1061
    %v1063 = vrot.slane %v1062, 2
    %v1064 = vadd.f32 %v1062, %v1063
    %v1065 = vrot.slane %v1064, 1
    %v1066 = vadd.f32 %v1064, %v1065
    %v1067 = vsel %vm617, %v1053, %v1066
    %1068 = vmatprep.subr.mxu0 0.0
    %1069 = vmatpush1.msra.mxu0 %v330
    %1070 = vmatprep.subr.mxu0 0.0
    %1071 = vmatpush1.msra.mxu0 %v329
    %1072 = vmatprep.subr.mxu0 0.0
    %1073 = vmatpush1.msra.mxu0 %v328
    %1074 = vmatprep.subr.mxu0 0.0
    %1075 = vmatpush1.msra.mxu0 %v327
    %1076 = vmatprep.subr.mxu0 0.0
    %1077 = vmatpush1.msra.mxu0 %v326
    %1078 = vmatprep.subr.mxu0 0.0
    %1079 = vmatpush1.msra.mxu0 %v325
    %1080 = vmatprep.subr.mxu0 0.0
    %1081 = vmatpush1.msra.mxu0 %v324
    %1082 = vmatprep.subr.mxu0 0.0
    %1083 = vmatpush1.msra.mxu0 %v323
    %1084 = vmatprep.subr.mxu0 0.0
    %1085 = vmatpush1.msra.mxu0 %v322
    %1086 = vmatprep.subr.mxu0 0.0
    %1087 = vmatpush1.msra.mxu0 %v321
    %1088 = vmatprep.subr.mxu0 0.0
    %1089 = vmatpush1.msra.mxu0 %v320
    %1090 = vmatprep.subr.mxu0 0.0
    %1091 = vmatpush1.msra.mxu0 %v319
    %1092 = vmatprep.subr.mxu0 0.0
    %1093 = vmatpush1.msra.mxu0 %v318
    %1094 = vmatprep.subr.mxu0 0.0
    %1095 = vmatpush1.msra.mxu0 %v317
    %1096 = vmatprep.subr.mxu0 0.0
    %1097 = vmatpush1.msra.mxu0 %v316
    %1098 = vmatprep.subr.mxu0 0.0
    %1099 = vmatpush1.msra.mxu0 %v315
    %1100 = vmatprep.subr.mxu0 0.0
    %1101 = vmatpush2.msra.mxu0 0.0
    %1102 = vmatprep.subr.mxu0 0.0
    %1103 = vmatpush2.msra.mxu0 0.0
    %1104 = vmatprep.subr.mxu0 0.0
    %1105 = vmatpush2.msra.mxu0 0.0
    %1106 = vmatprep.subr.mxu0 0.0
    %1107 = vmatpush2.msra.mxu0 0.0
    %1108 = vmatprep.subr.mxu0 0.0
    %1109 = vmatpush2.msra.mxu0 0.0
    %1110 = vmatprep.subr.mxu0 0.0
    %1111 = vmatpush2.msra.mxu0 0.0
    %1112 = vmatprep.subr.mxu0 0.0
    %1113 = vmatpush2.msra.mxu0 0.0
    %1114 = vmatprep.subr.mxu0 0.0
    %1115 = vmatpush2.msra.mxu0 0.0
    %1116 = vmatprep.subr.mxu0 0.0
    %1117 = vmatpush2.msra.mxu0 0.0
    %1118 = vmatprep.subr.mxu0 0.0
    %1119 = vmatpush2.msra.mxu0 0.0
    %1120 = vmatprep.subr.mxu0 0.0
    %1121 = vmatpush2.msra.mxu0 0.0
    %1122 = vmatprep.subr.mxu0 0.0
    %1123 = vmatpush2.msra.mxu0 0.0
    %1124 = vmatprep.subr.mxu0 0.0
    %1125 = vmatpush2.msra.mxu0 0.0
    %1126 = vmatprep.subr.mxu0 0.0
    %1127 = vmatpush2.msra.mxu0 0.0
    %1128 = vmatprep.subr.mxu0 0.0
    %1129 = vmatpush2.msra.mxu0 0.0
    %1130 = vmatprep.subr.mxu0 0.0
    %1131 = vmatpush2.msra.mxu0 0.0
    %1132 = vmatprep.mubr.f32.mxu0 0.0
    %1133 = vmatmul.mubr.f32.gmra.mxu0 %v1067
    %v1134 = vpop.f32.mrf.mxu0
    %v1135 = vadd.f32 0.0, %v1134
    %v1136 = vpop.f32.mrf.mxu0
    %1137 = vdwg.mxu0
    %v1138 = vmul.f32 %v1135, 0.001953125
    %v1139 = vmul.f32 %v1138, %v1138
    %v1141 = vrot.slane %v1139, 7
    %v1143 = vsub.f32 %v1138, %v1141
    %v1144 = vadd.f32 %v1143, 1e-05
    %v1145 = vrsqrt.pop %v1144
    %v1147 = vrot.slane %v1145, 1
    %v1149 = vmul.f32 %v1043, %v1147
    %v1150 = vmul.f32 %v1138, %v1149
    %v1151 = vsub.f32 %v1044, %v1150
    %v1152 = vlaneseq
    %v1153 = vshrl.u32 %v1152, 7
    %v1154 = vsub.s32 0, %v1153
    %v1155 = vrot.slane %v1149, %v1154
    %v1156 = vmul.f32 %v1029, %v1155
    %v1157 = vmul.f32 %v1032, %v1155
    %v1158 = vmul.f32 %v1037, %v1155
    %v1159 = vmul.f32 %v1040, %v1155
    %v1160 = vlaneseq
    %v1161 = vshrl.u32 %v1160, 7
    %v1162 = vsub.s32 0, %v1161
    %v1163 = vrot.slane %v1151, %v1162
    %v1164 = vadd.f32 %v1156, %v1163
    %v1165 = vadd.f32 %v1157, %v1163
    %v1166 = vadd.f32 %v1158, %v1163
    %v1167 = vadd.f32 %v1159, %v1163
    %v1168 = vmax.f32 %v1164, 0.0
    %v1169 = vmax.f32 %v1165, 0.0
    %v1170 = vmax.f32 %v1166, 0.0
    %v1171 = vmax.f32 %v1167, 0.0
    %1172 = vst [vmem:[#allocation8] sm:$0xff] %v1168
    %1173 = vst [vmem:[#allocation8 + $0x8] sm:$0xff] %v1169
    %1174 = vst [vmem:[#allocation8 + $0x10] sm:$0xff] %v1170
    %1175 = vst [vmem:[#allocation8 + $0x18] sm:$0xff] %v1171
    // Predicated region
    $region30: #{tpu_custom_call.1} parent=1 // pred_check
      _
    $region31: #{tpu_custom_call.1} parent=1 // pred_check_branch
      %1177 = sbr.rel (0) target = $region33
    $region32: #{tpu_custom_call.1} parent=1 // pred_region
      %s1179 = ssub.s32 512, 512
      %1180 = vsyncadd [#allocation4], %s1179
      %s1181 = sshll.u32 [#allocation8], 4
      %s1182 = int_to_ptr.vmem [resolvable:$true] %s1181
      %1187 = dma.vmem_to_hbm [thread:$0]  %s1182, 512, %s4, [#allocation4], 128, 128, 8
    $region33: #{tpu_custom_call.1} parent=1 // pred_fallthru
      _
    // Predicated region
    $region34: #{tpu_custom_call.1} parent=1 // pred_check
      _
    $region35: #{tpu_custom_call.1} parent=1 // pred_check_branch
      %1189 = sbr.rel (0) target = $region37
    $region36: #{tpu_custom_call.1} parent=1 // pred_region
      %1190 = dma.done [#allocation4], 512
    $region37: #{tpu_custom_call.1} parent=1 // pred_fallthru
      _
    %1191 = vsyncpa [#allocation3], 1
    %1192 = vsyncpa [#allocation6], 1
    %1193 = vsyncpa [#allocation4], 1

</llo_original>
